<compile_context>
chip_gen: v7x
topology: tpu7x:2x2x1
jax: 0.10.0
libtpu: 0.0.40
codegen_flags: <defaults>
</compile_context>

<pallas_src>
import jax
import jax.numpy as jnp
from jax.experimental import pallas as pl
from jax.experimental.pallas import tpu as pltpu


def _ffn_kernel(x_ref, fatproj_ref, w1x_ref, b1_ref, w2_ref, b2_ref,
                gamma_ref, beta_ref, o_ref):
    # x:        (TL, d_in)      f32 (also the residual)
    # fatproj:  (1, d_hid)      f32   fatigue_vec @ W1[d_in:, :] for this batch
    # w1x:      (d_in, d_hid)   bf16  (resident across the grid)
    # b1:       (1, d_hid)      f32
    # w2:       (d_hid, d_in)   bf16  (resident across the grid)
    # b2/gamma/beta: (1, d_in)  f32
    x = x_ref[...]

    # w_1 (+ fatigue projection) + ReLU — bf16 MXU matmul, f32 accumulation.
    h = jnp.dot(x.astype(jnp.bfloat16), w1x_ref[...],
                preferred_element_type=jnp.float32)
    h = jnp.maximum(h + fatproj_ref[...] + b1_ref[...], 0.0)

    # w_2 — bf16 MXU matmul, f32 accumulation.
    y = jnp.dot(h.astype(jnp.bfloat16), w2_ref[...],
                preferred_element_type=jnp.float32)

    # dropout (eval mode) == identity, then residual add (f32).
    y = y + b2_ref[...] + x

    # LayerNorm over last dim, eps=1e-6, biased variance (PyTorch semantics).
    mean = jnp.mean(y, axis=-1, keepdims=True)
    c = y - mean
    var = jnp.mean(c * c, axis=-1, keepdims=True)
    y_norm = c * jax.lax.rsqrt(var + 1e-6)
    o_ref[...] = (y_norm * gamma_ref[...] + beta_ref[...]).astype(o_ref.dtype)


def positionwise_feed_forward(x, fatigue_vec, params, *, seq_tile=256):
    """x: (B, L, d_in) f32, fatigue_vec: (B, d_fatigue) f32."""
    B, L, d_in = x.shape
    w1x, w1f = params["w1x"], params["w1f"]           # bf16
    b1, w2, b2 = params["b1"], params["w2"], params["b2"]
    gamma, beta = params["gamma"], params["beta"]
    d_hid = w1x.shape[1]

    # Fatigue projection: one tiny matmul per batch row (shared by all L
    # positions) instead of materializing the (B*L, d_in+d_fatigue) concat.
    fat_proj = jnp.dot(fatigue_vec.astype(jnp.bfloat16), w1f,
                       preferred_element_type=jnp.float32)      # (B, d_hid) f32
    fat_proj = fat_proj.reshape(B, 1, d_hid)

    # Row tile over the sequence axis. Guidance: ~128-256 on v5e, 512-1024 on
    # v6e (raise vmem_limit further if desired), 256-512 on v7x (64 MiB VMEM).
    tl = min(L, seq_tile)
    if L % tl != 0:
        tl = L  # TODO(synk): boundary masking for ragged L (toy shapes divide evenly)

    grid = (B, L // tl)

    def tok_spec():
        return pl.BlockSpec((None, tl, d_in), lambda b, l: (b, l, 0))

    def const_spec(shape):
        return pl.BlockSpec(shape, lambda b, l: (0, 0))

    n_tokens = B * L
    cost = pl.CostEstimate(
        flops=2 * n_tokens * d_in * d_hid + 2 * n_tokens * d_hid * d_in,
        transcendentals=n_tokens,
        bytes_accessed=(2 * n_tokens * d_in * 4                # x in + out
                        + B * d_hid * 4                        # fat_proj
                        + (d_in * d_hid + d_hid * d_in) * 2    # bf16 weights
                        + (d_hid + 3 * d_in) * 4),             # biases / affine
    )

    out = pl.pallas_call(
        _ffn_kernel,
        out_shape=jax.ShapeDtypeStruct((B, L, d_in), x.dtype),
        grid=grid,
        in_specs=[
            tok_spec(),                                              # x / residual
            pl.BlockSpec((None, 1, d_hid), lambda b, l: (b, 0, 0)),  # fat_proj
            const_spec((d_in, d_hid)),                               # w1x (resident)
            const_spec((1, d_hid)),                                  # b1
            const_spec((d_hid, d_in)),                               # w2 (resident)
            const_spec((1, d_in)),                                   # b2
            const_spec((1, d_in)),                                   # gamma
            const_spec((1, d_in)),                                   # beta
        ],
        out_specs=tok_spec(),
        compiler_params=pltpu.CompilerParams(
            dimension_semantics=("parallel", "parallel"),
            vmem_limit_bytes=48 * 1024 * 1024,
        ),
        cost_estimate=cost,
    )(x, fat_proj, w1x, b1, w2, b2, gamma, beta)
    return out


def init_params(key, d_in, d_fatigue, expansion):
    d_hid = d_in * expansion
    k1, k2, k3, k4 = jax.random.split(key, 4)
    s1 = 1.0 / jnp.sqrt(d_in + d_fatigue)
    s2 = 1.0 / jnp.sqrt(d_hid)
    w1_t = jax.random.uniform(k1, (d_in + d_fatigue, d_hid), jnp.float32, -s1, s1)
    w2_t = jax.random.uniform(k3, (d_hid, d_in), jnp.float32, -s2, s2)
    return {
        # W1 stored transposed (input-major) and split into x / fatigue parts,
        # kept in bf16 for the MXU (accumulation stays f32 in-kernel).
        "w1x": w1_t[:d_in].astype(jnp.bfloat16),
        "w1f": w1_t[d_in:].astype(jnp.bfloat16),
        "b1": jax.random.uniform(k2, (1, d_hid), jnp.float32, -s1, s1),
        "w2": w2_t.astype(jnp.bfloat16),
        "b2": jax.random.uniform(k4, (1, d_in), jnp.float32, -s2, s2),
        "gamma": jnp.ones((1, d_in), jnp.float32),
        "beta": jnp.zeros((1, d_in), jnp.float32),
    }


if __name__ == "__main__":
    B, L, d_in, d_fatigue, expansion = 2, 8, 32, 16, 2

    key = jax.random.PRNGKey(0)
    kx, kf, kp = jax.random.split(key, 3)
    x = jax.random.normal(kx, (B, L, d_in), jnp.float32)
    fatigue_vec = jax.random.normal(kf, (B, d_fatigue), jnp.float32)
    params = init_params(kp, d_in, d_fatigue, expansion)

    out = positionwise_feed_forward(x, fatigue_vec, params)
    jax.block_until_ready(out)

    # Pure-JAX reference (module math in f32; weights upcast from bf16).
    w1_full = jnp.concatenate(
        [params["w1x"], params["w1f"]], axis=0).astype(jnp.float32)
    fat = jnp.broadcast_to(fatigue_vec[:, None, :], (B, L, d_fatigue))
    xc = jnp.concatenate([x, fat], axis=-1)
    h = jnp.maximum(xc @ w1_full + params["b1"], 0.0)
    y = h @ params["w2"].astype(jnp.float32) + params["b2"] + x
    mu = y.mean(-1, keepdims=True)
    var = ((y - mu) ** 2).mean(-1, keepdims=True)
    ref = (y - mu) / jnp.sqrt(var + 1e-6) * params["gamma"] + params["beta"]
    # bf16 activations on the MXU path -> compare at bf16-appropriate tolerance.
    assert jnp.allclose(out, ref, atol=2e-2, rtol=2e-2), "mismatch vs reference"

    print("KERNEL_OK")
</pallas_src>

<mosaic_0001>
module attributes {stable_mosaic.version = 11 : i64} {
  func.func @_ffn_kernel(%arg0: i32, %arg1: i32, %arg2: memref<1x8x32xf32, #tpu.memory_space<vmem>>, %arg3: memref<1x1x64xf32, #tpu.memory_space<vmem>>, %arg4: memref<32x64xbf16, #tpu.memory_space<vmem>>, %arg5: memref<1x64xf32, #tpu.memory_space<vmem>>, %arg6: memref<64x32xbf16, #tpu.memory_space<vmem>>, %arg7: memref<1x32xf32, #tpu.memory_space<vmem>>, %arg8: memref<1x32xf32, #tpu.memory_space<vmem>>, %arg9: memref<1x32xf32, #tpu.memory_space<vmem>>, %arg10: memref<1x8x32xf32, #tpu.memory_space<vmem>>) attributes {dimension_semantics = [#tpu.dimension_semantics<parallel>, #tpu.dimension_semantics<parallel>], iteration_bounds = array<i64: 2, 1>, scalar_prefetch = 0 : i64, scratch_operands = 0 : i64, tpu.core_type = #tpu.core_type<tc>, window_params = [{transform_indices = @transform_0, window_bounds = array<i64: 1, 8, 32>}, {transform_indices = @transform_1, window_bounds = array<i64: 1, 1, 64>}, {pipeline_mode = #tpu.pipeline_mode<synchronous>, transform_indices = @transform_2, window_bounds = array<i64: 32, 64>}, {pipeline_mode = #tpu.pipeline_mode<synchronous>, transform_indices = @transform_3, window_bounds = array<i64: 1, 64>}, {pipeline_mode = #tpu.pipeline_mode<synchronous>, transform_indices = @transform_4, window_bounds = array<i64: 64, 32>}, {pipeline_mode = #tpu.pipeline_mode<synchronous>, transform_indices = @transform_5, window_bounds = array<i64: 1, 32>}, {pipeline_mode = #tpu.pipeline_mode<synchronous>, transform_indices = @transform_6, window_bounds = array<i64: 1, 32>}, {pipeline_mode = #tpu.pipeline_mode<synchronous>, transform_indices = @transform_7, window_bounds = array<i64: 1, 32>}, {transform_indices = @transform_8, window_bounds = array<i64: 1, 8, 32>}]} {
    %c0 = arith.constant 0 : index
    %c0_0 = arith.constant 0 : index
    %c0_1 = arith.constant 0 : index
    %0 = vector.load %arg2[%c0, %c0_0, %c0_1] : memref<1x8x32xf32, #tpu.memory_space<vmem>>, vector<1x8x32xf32>
    %1 = vector.shape_cast %0 : vector<1x8x32xf32> to vector<8x32xf32>
    %2 = arith.truncf %1 : vector<8x32xf32> to vector<8x32xbf16>
    %c0_2 = arith.constant 0 : index
    %c0_3 = arith.constant 0 : index
    %3 = vector.load %arg4[%c0_2, %c0_3] : memref<32x64xbf16, #tpu.memory_space<vmem>>, vector<32x64xbf16>
    %cst = arith.constant dense<0.000000e+00> : vector<8x64xf32>
    %4 = tpu.matmul %2, %3, %cst {dimension_numbers = #tpu.dot_dimension_numbers<[1], [0], [0], [1], [0, 0, 1, 1], [], []>} : vector<8x32xbf16>, vector<32x64xbf16>, vector<8x64xf32> -> vector<8x64xf32>
    %c0_4 = arith.constant 0 : index
    %c0_5 = arith.constant 0 : index
    %c0_6 = arith.constant 0 : index
    %5 = vector.load %arg3[%c0_4, %c0_5, %c0_6] : memref<1x1x64xf32, #tpu.memory_space<vmem>>, vector<1x1x64xf32>
    %6 = vector.shape_cast %5 : vector<1x1x64xf32> to vector<1x64xf32>
    %7 = vector.broadcast %6 : vector<1x64xf32> to vector<8x64xf32>
    %8 = arith.addf %4, %7 : vector<8x64xf32>
    %c0_7 = arith.constant 0 : index
    %c0_8 = arith.constant 0 : index
    %9 = vector.load %arg5[%c0_7, %c0_8] : memref<1x64xf32, #tpu.memory_space<vmem>>, vector<1x64xf32>
    %10 = vector.broadcast %9 : vector<1x64xf32> to vector<8x64xf32>
    %11 = arith.addf %8, %10 : vector<8x64xf32>
    %cst_9 = arith.constant 0.000000e+00 : f32
    %12 = vector.broadcast %cst_9 : f32 to vector<8x64xf32>
    %13 = arith.maximumf %11, %12 : vector<8x64xf32>
    %14 = arith.truncf %13 : vector<8x64xf32> to vector<8x64xbf16>
    %c0_10 = arith.constant 0 : index
    %c0_11 = arith.constant 0 : index
    %15 = vector.load %arg6[%c0_10, %c0_11] : memref<64x32xbf16, #tpu.memory_space<vmem>>, vector<64x32xbf16>
    %cst_12 = arith.constant dense<0.000000e+00> : vector<8x32xf32>
    %16 = tpu.matmul %14, %15, %cst_12 {dimension_numbers = #tpu.dot_dimension_numbers<[1], [0], [0], [1], [0, 0, 1, 1], [], []>} : vector<8x64xbf16>, vector<64x32xbf16>, vector<8x32xf32> -> vector<8x32xf32>
    %c0_13 = arith.constant 0 : index
    %c0_14 = arith.constant 0 : index
    %17 = vector.load %arg7[%c0_13, %c0_14] : memref<1x32xf32, #tpu.memory_space<vmem>>, vector<1x32xf32>
    %18 = vector.broadcast %17 : vector<1x32xf32> to vector<8x32xf32>
    %19 = arith.addf %16, %18 : vector<8x32xf32>
    %20 = arith.addf %19, %1 : vector<8x32xf32>
    %cst_15 = arith.constant dense<0.000000e+00> : vector<8xf32>
    %21 = vector.multi_reduction <add>, %20, %cst_15 [1] : vector<8x32xf32> to vector<8xf32>
    %22 = vector.shape_cast %21 : vector<8xf32> to vector<8x1xf32>
    %cst_16 = arith.constant 3.200000e+01 : f32
    %23 = vector.broadcast %cst_16 : f32 to vector<8x1xf32>
    %24 = arith.divf %22, %23 : vector<8x1xf32>
    %25 = vector.broadcast %24 : vector<8x1xf32> to vector<8x32xf32>
    %26 = arith.subf %20, %25 : vector<8x32xf32>
    %27 = arith.mulf %26, %26 : vector<8x32xf32>
    %cst_17 = arith.constant dense<0.000000e+00> : vector<8xf32>
    %28 = vector.multi_reduction <add>, %27, %cst_17 [1] : vector<8x32xf32> to vector<8xf32>
    %29 = vector.shape_cast %28 : vector<8xf32> to vector<8x1xf32>
    %cst_18 = arith.constant 3.200000e+01 : f32
    %30 = vector.broadcast %cst_18 : f32 to vector<8x1xf32>
    %31 = arith.divf %29, %30 : vector<8x1xf32>
    %cst_19 = arith.constant 9.99999997E-7 : f32
    %32 = vector.broadcast %cst_19 : f32 to vector<8x1xf32>
    %33 = arith.addf %31, %32 : vector<8x1xf32>
    %34 = math.rsqrt %33 : vector<8x1xf32>
    %35 = vector.broadcast %34 : vector<8x1xf32> to vector<8x32xf32>
    %36 = arith.mulf %26, %35 : vector<8x32xf32>
    %c0_20 = arith.constant 0 : index
    %c0_21 = arith.constant 0 : index
    %37 = vector.load %arg8[%c0_20, %c0_21] : memref<1x32xf32, #tpu.memory_space<vmem>>, vector<1x32xf32>
    %38 = vector.broadcast %37 : vector<1x32xf32> to vector<8x32xf32>
    %39 = arith.mulf %36, %38 : vector<8x32xf32>
    %c0_22 = arith.constant 0 : index
    %c0_23 = arith.constant 0 : index
    %40 = vector.load %arg9[%c0_22, %c0_23] : memref<1x32xf32, #tpu.memory_space<vmem>>, vector<1x32xf32>
    %41 = vector.broadcast %40 : vector<1x32xf32> to vector<8x32xf32>
    %42 = arith.addf %39, %41 : vector<8x32xf32>
    %c0_24 = arith.constant 0 : index
    %c0_25 = arith.constant 0 : index
    %c0_26 = arith.constant 0 : index
    %43 = vector.load %arg10[%c0_24, %c0_25, %c0_26] : memref<1x8x32xf32, #tpu.memory_space<vmem>>, vector<1x8x32xf32>
    %44 = vector.shape_cast %43 : vector<1x8x32xf32> to vector<8x32xf32>
    %45 = vector.shape_cast %42 : vector<8x32xf32> to vector<1x8x32xf32>
    tpu.vector_store %arg10[%c0_24, %c0_25, %c0_26], %45 {strides = array<i32>} : memref<1x8x32xf32, #tpu.memory_space<vmem>>, vector<1x8x32xf32>,
    return
  }
  func.func @transform_0(%arg0: i32, %arg1: i32) -> (i32, i32, i32) {
    %c0_i32 = arith.constant 0 : i32
    %c0_i32_0 = arith.constant 0 : i32
    return %arg0, %arg1, %c0_i32 : i32, i32, i32
  }
  func.func @transform_1(%arg0: i32, %arg1: i32) -> (i32, i32, i32) {
    %c0_i32 = arith.constant 0 : i32
    %c0_i32_0 = arith.constant 0 : i32
    %c0_i32_1 = arith.constant 0 : i32
    return %arg0, %c0_i32, %c0_i32_0 : i32, i32, i32
  }
  func.func @transform_2(%arg0: i32, %arg1: i32) -> (i32, i32) {
    %c0_i32 = arith.constant 0 : i32
    %c0_i32_0 = arith.constant 0 : i32
    %c0_i32_1 = arith.constant 0 : i32
    return %c0_i32, %c0_i32_0 : i32, i32
  }
  func.func @transform_3(%arg0: i32, %arg1: i32) -> (i32, i32) {
    %c0_i32 = arith.constant 0 : i32
    %c0_i32_0 = arith.constant 0 : i32
    %c0_i32_1 = arith.constant 0 : i32
    return %c0_i32, %c0_i32_0 : i32, i32
  }
  func.func @transform_4(%arg0: i32, %arg1: i32) -> (i32, i32) {
    %c0_i32 = arith.constant 0 : i32
    %c0_i32_0 = arith.constant 0 : i32
    %c0_i32_1 = arith.constant 0 : i32
    return %c0_i32, %c0_i32_0 : i32, i32
  }
  func.func @transform_5(%arg0: i32, %arg1: i32) -> (i32, i32) {
    %c0_i32 = arith.constant 0 : i32
    %c0_i32_0 = arith.constant 0 : i32
    %c0_i32_1 = arith.constant 0 : i32
    return %c0_i32, %c0_i32_0 : i32, i32
  }
  func.func @transform_6(%arg0: i32, %arg1: i32) -> (i32, i32) {
    %c0_i32 = arith.constant 0 : i32
    %c0_i32_0 = arith.constant 0 : i32
    %c0_i32_1 = arith.constant 0 : i32
    return %c0_i32, %c0_i32_0 : i32, i32
  }
  func.func @transform_7(%arg0: i32, %arg1: i32) -> (i32, i32) {
    %c0_i32 = arith.constant 0 : i32
    %c0_i32_0 = arith.constant 0 : i32
    %c0_i32_1 = arith.constant 0 : i32
    return %c0_i32, %c0_i32_0 : i32, i32
  }
  func.func @transform_8(%arg0: i32, %arg1: i32) -> (i32, i32, i32) {
    %c0_i32 = arith.constant 0 : i32
    %c0_i32_0 = arith.constant 0 : i32
    return %arg0, %arg1, %c0_i32 : i32, i32, i32
  }
}

</mosaic_0001>

<llo_original>
// kernel: tpu_custom_call.1
$region0: #{tpu_custom_call.1}
  #allocation0 [shape = 'u32[]', space=smem, size = 0x4, offset = 0x4, fixed_abs, tag = 'smem constant byte address 0x4 - core index']
  #allocation1 [shape = 'u32[144,128]{1,0:T(1,128)}', space=vmem, size = 0x12000, scoped, tag = 'internal scratch']
  %s0 = inlined_call_operand.vmem [shape: f32[2,8,32], index: 0, kind: input, shape index: {}]
  %s1 = inlined_call_operand.vmem [shape: f32[2,1,64], index: 1, kind: input, shape index: {}]
  %s2 = inlined_call_operand.vmem [shape: bf16[32,64], index: 2, kind: input, shape index: {}]
  %s3 = inlined_call_operand.vmem [shape: f32[1,64], index: 3, kind: input, shape index: {}]
  %s4 = inlined_call_operand.vmem [shape: bf16[64,32], index: 4, kind: input, shape index: {}]
  %s5 = inlined_call_operand.vmem [shape: f32[1,32], index: 5, kind: input, shape index: {}]
  %s6 = inlined_call_operand.vmem [shape: f32[1,32], index: 6, kind: input, shape index: {}]
  %s7 = inlined_call_operand.vmem [shape: f32[1,32], index: 7, kind: input, shape index: {}]
  %s8 = inlined_call_operand.hbm [shape: f32[2,8,32], index: 8, kind: output, shape index: {}]
  %s9 = sld [smem:[#allocation0]]
  $region65: #{tpu_custom_call.1} parent=0
    _
  %s11 = ssub.s32 1, %s9
  %s12 = scalar_select 0, %s11, %s9
  $region1: #{tpu_custom_call.1} parent=0
    #allocation2 [shape = 'u8[8192]{0}', space=vmem, size = 0x2000, scoped, tag = 'output window, operand 0']
    #allocation3 [shape = 's32[2]{0}', space=sflag, size = 0x8, scoped, tag = 'scoped memory for tpu_custom_call.1']
    %13 = vsyncpa [#allocation3], 0
    %s14 = scalar_lea.sflag [#allocation3], 1
    %15 = vsyncpa %s14, 0
    loop: start=0, step=1, limit=4
    $region2: #{tpu_custom_call.1} parent=1 // loop_pre_header
      _
    $region3: #{tpu_custom_call.1} parent=1 // loop_header
      %s17 = sphi 0, %s21
      %p18 = scmp.ge.s32.totalorder %s17, 4
      %s24 = sphi 0, %s36
      %s25 = sphi 0, %s32
      %s26 = sphi 0, %s24
      %s27 = sphi 0, %s25
      %s28 = sphi 0, %s26
      %s29 = sphi 0, %s27
      %s41 = sphi 0, %s43
      %s44 = sphi 0, %s41
      %s45 = sphi 0, %s44
      %s61 = sphi 0, %s45
      %s67 = sphi 0, %s69
      %s70 = sphi 0, %s67
      %s71 = sphi 0, %s70
      %s87 = sphi 0, %s71
      %s91 = sphi 0, %s91
      %s93 = sphi 0, %s91
      %s94 = sphi 0, %s93
      %s108 = sphi 0, %s94
      %s112 = sphi 0, %s112
      %s114 = sphi 0, %s112
      %s115 = sphi 0, %s114
      %s129 = sphi 0, %s115
      %s133 = sphi 0, %s133
      %s135 = sphi 0, %s133
      %s136 = sphi 0, %s135
      %s150 = sphi 0, %s136
      %s154 = sphi 0, %s154
      %s156 = sphi 0, %s154
      %s157 = sphi 0, %s156
      %s171 = sphi 0, %s157
      %s175 = sphi 0, %s175
      %s177 = sphi 0, %s175
      %s178 = sphi 0, %s177
      %s192 = sphi 0, %s178
      %s196 = sphi 0, %s196
      %s198 = sphi 0, %s196
      %s199 = sphi 0, %s198
      %s213 = sphi 0, %s199
      %s221 = sphi 0, %s223
      %s224 = sphi 0, %s221
      %s225 = sphi 0, %s224
      %s241 = sphi 0, %s225
    $region4: #{tpu_custom_call.1} parent=1 // loop_header_branch
      %20 = sbr.rel (%p18) target = $region8
    $region5: #{tpu_custom_call.1} parent=1 // loop_body
      %s22 = ssub.s32 %s17, 1
      %s23 = ssub.s32 %s17, 2
      %s30 = sadd.s32 1, %s25
      %p31 = scmp.ge.s32.totalorder %s30, 1
      %s32 = scalar_select %p31, 0, %s30
      %s33 = sadd.s32 1, %s24
      %s34 = scalar_select %p31, %s33, %s24
      %p35 = scmp.ge.s32.totalorder %s34, 2
      %s36 = scalar_select %p35, 0, %s34
      %s37 = ssub.s32 %s24, %s36
      %s38 = ssub.s32 %s25, %s32
      %s39 = sor.u32 %s37, %s38
      %p40 = scmp.eq.s32.totalorder %s39, 0
      %s42 = sadd.s32 %s41, 1
      %s43 = scalar_select %p40, %s41, %s42
      %p46 = pneg %p40
      %p47 = scmp.eq.s32.totalorder %s17, 1
      %p48 = por %p46, %p47
      %p49 = scmp.ne.s32.totalorder %s41, %s44
      %p50 = scmp.eq.s32.totalorder %s17, 0
      %p51 = por %p49, %p50
      %p52 = scmp.ne.s32.totalorder %s41, %s44
      %p53 = scmp.eq.s32.totalorder %s22, 1
      %p54 = por %p52, %p53
      %p55 = scmp.ne.s32.totalorder %s44, %s45
      %p56 = scmp.eq.s32.totalorder %s22, 0
      %p57 = por %p55, %p56
      %p58 = scmp.ne.s32.totalorder %s44, %s45
      %p59 = scmp.eq.s32.totalorder %s23, 1
      %p60 = por %p58, %p59
      %p62 = scmp.ne.s32.totalorder %s45, %s61
      %p63 = scmp.eq.s32.totalorder %s23, 0
      %p64 = por %p62, %p63
      %s65 = ssub.s32 %s24, %s36
      %p66 = scmp.eq.s32.totalorder %s65, 0
      %s68 = sadd.s32 %s67, 1
      %s69 = scalar_select %p66, %s67, %s68
      %p72 = pneg %p66
      %p73 = scmp.eq.s32.totalorder %s17, 1
      %p74 = por %p72, %p73
      %p75 = scmp.ne.s32.totalorder %s67, %s70
      %p76 = scmp.eq.s32.totalorder %s17, 0
      %p77 = por %p75, %p76
      %p78 = scmp.ne.s32.totalorder %s67, %s70
      %p79 = scmp.eq.s32.totalorder %s22, 1
      %p80 = por %p78, %p79
      %p81 = scmp.ne.s32.totalorder %s70, %s71
      %p82 = scmp.eq.s32.totalorder %s22, 0
      %p83 = por %p81, %p82
      %p84 = scmp.ne.s32.totalorder %s70, %s71
      %p85 = scmp.eq.s32.totalorder %s23, 1
      %p86 = por %p84, %p85
      %p88 = scmp.ne.s32.totalorder %s71, %s87
      %p89 = scmp.eq.s32.totalorder %s23, 0
      %p90 = por %p88, %p89
      %s92 = sadd.s32 %s91, 1
      %p95 = scmp.eq.s32.totalorder %s17, 1
      %p96 = scmp.ne.s32.totalorder %s91, %s93
      %p97 = scmp.eq.s32.totalorder %s17, 0
      %p98 = por %p96, %p97
      %p99 = scmp.ne.s32.totalorder %s91, %s93
      %p100 = scmp.eq.s32.totalorder %s22, 1
      %p101 = por %p99, %p100
      %p102 = scmp.ne.s32.totalorder %s93, %s94
      %p103 = scmp.eq.s32.totalorder %s22, 0
      %p104 = por %p102, %p103
      %p105 = scmp.ne.s32.totalorder %s93, %s94
      %p106 = scmp.eq.s32.totalorder %s23, 1
      %p107 = por %p105, %p106
      %p109 = scmp.ne.s32.totalorder %s94, %s108
      %p110 = scmp.eq.s32.totalorder %s23, 0
      %p111 = por %p109, %p110
      %s113 = sadd.s32 %s112, 1
      %p116 = scmp.eq.s32.totalorder %s17, 1
      %p117 = scmp.ne.s32.totalorder %s112, %s114
      %p118 = scmp.eq.s32.totalorder %s17, 0
      %p119 = por %p117, %p118
      %p120 = scmp.ne.s32.totalorder %s112, %s114
      %p121 = scmp.eq.s32.totalorder %s22, 1
      %p122 = por %p120, %p121
      %p123 = scmp.ne.s32.totalorder %s114, %s115
      %p124 = scmp.eq.s32.totalorder %s22, 0
      %p125 = por %p123, %p124
      %p126 = scmp.ne.s32.totalorder %s114, %s115
      %p127 = scmp.eq.s32.totalorder %s23, 1
      %p128 = por %p126, %p127
      %p130 = scmp.ne.s32.totalorder %s115, %s129
      %p131 = scmp.eq.s32.totalorder %s23, 0
      %p132 = por %p130, %p131
      %s134 = sadd.s32 %s133, 1
      %p137 = scmp.eq.s32.totalorder %s17, 1
      %p138 = scmp.ne.s32.totalorder %s133, %s135
      %p139 = scmp.eq.s32.totalorder %s17, 0
      %p140 = por %p138, %p139
      %p141 = scmp.ne.s32.totalorder %s133, %s135
      %p142 = scmp.eq.s32.totalorder %s22, 1
      %p143 = por %p141, %p142
      %p144 = scmp.ne.s32.totalorder %s135, %s136
      %p145 = scmp.eq.s32.totalorder %s22, 0
      %p146 = por %p144, %p145
      %p147 = scmp.ne.s32.totalorder %s135, %s136
      %p148 = scmp.eq.s32.totalorder %s23, 1
      %p149 = por %p147, %p148
      %p151 = scmp.ne.s32.totalorder %s136, %s150
      %p152 = scmp.eq.s32.totalorder %s23, 0
      %p153 = por %p151, %p152
      %s155 = sadd.s32 %s154, 1
      %p158 = scmp.eq.s32.totalorder %s17, 1
      %p159 = scmp.ne.s32.totalorder %s154, %s156
      %p160 = scmp.eq.s32.totalorder %s17, 0
      %p161 = por %p159, %p160
      %p162 = scmp.ne.s32.totalorder %s154, %s156
      %p163 = scmp.eq.s32.totalorder %s22, 1
      %p164 = por %p162, %p163
      %p165 = scmp.ne.s32.totalorder %s156, %s157
      %p166 = scmp.eq.s32.totalorder %s22, 0
      %p167 = por %p165, %p166
      %p168 = scmp.ne.s32.totalorder %s156, %s157
      %p169 = scmp.eq.s32.totalorder %s23, 1
      %p170 = por %p168, %p169
      %p172 = scmp.ne.s32.totalorder %s157, %s171
      %p173 = scmp.eq.s32.totalorder %s23, 0
      %p174 = por %p172, %p173
      %s176 = sadd.s32 %s175, 1
      %p179 = scmp.eq.s32.totalorder %s17, 1
      %p180 = scmp.ne.s32.totalorder %s175, %s177
      %p181 = scmp.eq.s32.totalorder %s17, 0
      %p182 = por %p180, %p181
      %p183 = scmp.ne.s32.totalorder %s175, %s177
      %p184 = scmp.eq.s32.totalorder %s22, 1
      %p185 = por %p183, %p184
      %p186 = scmp.ne.s32.totalorder %s177, %s178
      %p187 = scmp.eq.s32.totalorder %s22, 0
      %p188 = por %p186, %p187
      %p189 = scmp.ne.s32.totalorder %s177, %s178
      %p190 = scmp.eq.s32.totalorder %s23, 1
      %p191 = por %p189, %p190
      %p193 = scmp.ne.s32.totalorder %s178, %s192
      %p194 = scmp.eq.s32.totalorder %s23, 0
      %p195 = por %p193, %p194
      %s197 = sadd.s32 %s196, 1
      %p200 = scmp.eq.s32.totalorder %s17, 1
      %p201 = scmp.ne.s32.totalorder %s196, %s198
      %p202 = scmp.eq.s32.totalorder %s17, 0
      %p203 = por %p201, %p202
      %p204 = scmp.ne.s32.totalorder %s196, %s198
      %p205 = scmp.eq.s32.totalorder %s22, 1
      %p206 = por %p204, %p205
      %p207 = scmp.ne.s32.totalorder %s198, %s199
      %p208 = scmp.eq.s32.totalorder %s22, 0
      %p209 = por %p207, %p208
      %p210 = scmp.ne.s32.totalorder %s198, %s199
      %p211 = scmp.eq.s32.totalorder %s23, 1
      %p212 = por %p210, %p211
      %p214 = scmp.ne.s32.totalorder %s199, %s213
      %p215 = scmp.eq.s32.totalorder %s23, 0
      %p216 = por %p214, %p215
      %s217 = ssub.s32 %s24, %s36
      %s218 = ssub.s32 %s25, %s32
      %s219 = sor.u32 %s217, %s218
      %p220 = scmp.eq.s32.totalorder %s219, 0
      %s222 = sadd.s32 %s221, 1
      %s223 = scalar_select %p220, %s221, %s222
      %p226 = pneg %p220
      %p227 = scmp.eq.s32.totalorder %s17, 1
      %p228 = por %p226, %p227
      %p229 = scmp.ne.s32.totalorder %s221, %s224
      %p230 = scmp.eq.s32.totalorder %s17, 0
      %p231 = por %p229, %p230
      %p232 = scmp.ne.s32.totalorder %s221, %s224
      %p233 = scmp.eq.s32.totalorder %s22, 1
      %p234 = por %p232, %p233
      %p235 = scmp.ne.s32.totalorder %s224, %s225
      %p236 = scmp.eq.s32.totalorder %s22, 0
      %p237 = por %p235, %p236
      %p238 = scmp.ne.s32.totalorder %s224, %s225
      %p239 = scmp.eq.s32.totalorder %s23, 1
      %p240 = por %p238, %p239
      %p242 = scmp.ne.s32.totalorder %s225, %s241
      %p243 = scmp.eq.s32.totalorder %s23, 0
      %p244 = por %p242, %p243
      %p245 = scmp.le.s32.totalorder 1, %s17
      %p246 = scmp.lt.s32.totalorder %s17, 3
      %p247 = pnand %p245, %p246
      %p248 = pneg %p247
      // Predicated region
      $region9: #{tpu_custom_call.1} parent=5 // pred_check
        _
      $region10: #{tpu_custom_call.1} parent=5 // pred_check_branch
        %250 = sbr.rel (%p247) target = $region12
      $region11: #{tpu_custom_call.1} parent=5 // pred_region
        %s251 = ssub.s32 %s17, 1
        // Predicated region
        $region13: #{tpu_custom_call.1} parent=11 // pred_check
          %p252 = pneg %p104
        $region14: #{tpu_custom_call.1} parent=11 // pred_check_branch
          %254 = sbr.rel (%p252) target = $region16
        $region15: #{tpu_custom_call.1} parent=11 // pred_region
          _
        $region16: #{tpu_custom_call.1} parent=11 // pred_fallthru
          _
        // Predicated region
        $region17: #{tpu_custom_call.1} parent=11 // pred_check
          %p255 = pneg %p125
        $region18: #{tpu_custom_call.1} parent=11 // pred_check_branch
          %257 = sbr.rel (%p255) target = $region20
        $region19: #{tpu_custom_call.1} parent=11 // pred_region
          _
        $region20: #{tpu_custom_call.1} parent=11 // pred_fallthru
          _
        // Predicated region
        $region21: #{tpu_custom_call.1} parent=11 // pred_check
          %p258 = pneg %p146
        $region22: #{tpu_custom_call.1} parent=11 // pred_check_branch
          %260 = sbr.rel (%p258) target = $region24
        $region23: #{tpu_custom_call.1} parent=11 // pred_region
          _
        $region24: #{tpu_custom_call.1} parent=11 // pred_fallthru
          _
        // Predicated region
        $region25: #{tpu_custom_call.1} parent=11 // pred_check
          %p261 = pneg %p167
        $region26: #{tpu_custom_call.1} parent=11 // pred_check_branch
          %263 = sbr.rel (%p261) target = $region28
        $region27: #{tpu_custom_call.1} parent=11 // pred_region
          _
        $region28: #{tpu_custom_call.1} parent=11 // pred_fallthru
          _
        // Predicated region
        $region29: #{tpu_custom_call.1} parent=11 // pred_check
          %p264 = pneg %p188
        $region30: #{tpu_custom_call.1} parent=11 // pred_check_branch
          %266 = sbr.rel (%p264) target = $region32
        $region31: #{tpu_custom_call.1} parent=11 // pred_region
          _
        $region32: #{tpu_custom_call.1} parent=11 // pred_fallthru
          _
        // Predicated region
        $region33: #{tpu_custom_call.1} parent=11 // pred_check
          %p267 = pneg %p209
        $region34: #{tpu_custom_call.1} parent=11 // pred_check_branch
          %269 = sbr.rel (%p267) target = $region36
        $region35: #{tpu_custom_call.1} parent=11 // pred_region
          _
        $region36: #{tpu_custom_call.1} parent=11 // pred_fallthru
          _
      $region12: #{tpu_custom_call.1} parent=5 // pred_fallthru
        _
      %p270 = scmp.lt.s32.totalorder %s17, 2
      // Predicated region
      $region37: #{tpu_custom_call.1} parent=5 // pred_check
        %p271 = pneg %p270
      $region38: #{tpu_custom_call.1} parent=5 // pred_check_branch
        %273 = sbr.rel (%p271) target = $region40
      $region39: #{tpu_custom_call.1} parent=5 // pred_region
        // Predicated region
        $region41: #{tpu_custom_call.1} parent=39 // pred_check
          %p274 = pneg %p51
        $region42: #{tpu_custom_call.1} parent=39 // pred_check_branch
          %276 = sbr.rel (%p274) target = $region44
        $region43: #{tpu_custom_call.1} parent=39 // pred_region
          %p277 = scmp.lt.s32.totalorder %s24, 1
          %s278 = scalar_select %p277, %s24, 1
          %p279 = scmp.lt.s32.totalorder %s25, 0
          %s280 = scalar_select %p279, %s25, 0
          %s281 = sadd.s32 %s280, %s278
          %s282 = smul.addr %s281, 8
          %s283 = scalar_lea.vmem %s0, %s282
        $region44: #{tpu_custom_call.1} parent=39 // pred_fallthru
          _
        // Predicated region
        $region45: #{tpu_custom_call.1} parent=39 // pred_check
          %p284 = pneg %p77
        $region46: #{tpu_custom_call.1} parent=39 // pred_check_branch
          %286 = sbr.rel (%p284) target = $region48
        $region47: #{tpu_custom_call.1} parent=39 // pred_region
          %p287 = scmp.lt.s32.totalorder %s24, 1
          %s288 = scalar_select %p287, %s24, 1
          %s289 = scalar_lea.vmem %s1, %s288
        $region48: #{tpu_custom_call.1} parent=39 // pred_fallthru
          _
      $region40: #{tpu_custom_call.1} parent=5 // pred_fallthru
        _
      %p290 = scmp.le.s32.totalorder 1, %s17
      %p291 = scmp.lt.s32.totalorder %s17, 3
      %p292 = pnand %p290, %p291
      %p293 = pneg %p292
      // Predicated region
      $region49: #{tpu_custom_call.1} parent=5 // pred_check
        _
      $region50: #{tpu_custom_call.1} parent=5 // pred_check_branch
        %295 = sbr.rel (%p292) target = $region52
      $region51: #{tpu_custom_call.1} parent=5 // pred_region
        %s296 = ssub.s32 %s17, 1
        %p297 = scmp.lt.s32.totalorder %s26, 1
        %s298 = scalar_select %p297, %s26, 1
        %p299 = scmp.lt.s32.totalorder %s27, 0
        %s300 = scalar_select %p299, %s27, 0
        %s301 = sadd.s32 %s300, %s298
        %s302 = smul.addr %s301, 8
        %s303 = scalar_lea.vmem %s0, %s302
        %p304 = pneg %p57
        %p305 = pneg %p54
        %p306 = scmp.lt.s32.totalorder %s26, 1
        %s307 = scalar_select %p306, %s26, 1
        %s308 = scalar_lea.vmem %s1, %s307
        %p309 = pneg %p83
        %p310 = pneg %p80
        %p311 = pneg %p104
        %p312 = pneg %p101
        %p313 = pneg %p125
        %p314 = pneg %p122
        %p315 = pneg %p146
        %p316 = pneg %p143
        %p317 = pneg %p167
        %p318 = pneg %p164
        %p319 = pneg %p188
        %p320 = pneg %p185
        %p321 = pneg %p209
        %p322 = pneg %p206
        %p323 = pneg %p237
        %p324 = pneg %p234
        %s325 = sand.u32 %s224, 1
        %s326 = scalar_lea.sflag [#allocation3], %s325
        %s327 = sand.u32 %s224, 1
        %s328 = smul.addr %s327, 8
        %s329 = scalar_lea.vmem [#allocation2], %s328
        %p330 = scmp.lt.s32.totalorder %s26, 1
        %s331 = scalar_select %p330, %s26, 1
        %p332 = scmp.lt.s32.totalorder %s27, 0
        %s333 = scalar_select %p332, %s27, 0
        %s334 = sadd.s32 %s333, %s331
        %s335 = smul.addr %s334, 8
        %s336 = scalar_lea.vmem %s0, %s335
        %p337 = scmp.lt.s32.totalorder %s26, 1
        %s338 = scalar_select %p337, %s26, 1
        %s339 = scalar_lea.vmem %s1, %s338
        %v341 = vld [vmem:[%s336] sm:$0xff]
        %v342 = vpack.c.bf16 %v341, %v341
        %v343 = vld [vmem:[%s2] sm:$0xf]
        %v344 = vld [vmem:[%s2 + $0x4] sm:$0xf]
        %v345 = vld [vmem:[%s2 + $0x8] sm:$0xf]
        %v346 = vld [vmem:[%s2 + $0xc] sm:$0xf]
        %v347 = vld [vmem:[%s339] sm:$0x1]
        %v349 = vlaneseq
        %v350 = vshrl.u32 %v349, 7
        %v351 = vsub.s32 0, %v350
        %v352 = vrot.slane %v347, %v351
        %v358 = vunpack.c.l.b16 %v343
        %v359 = vunpack.c.l.b16 %v344
        %v360 = vunpack.c.l.b16 %v345
        %v361 = vunpack.c.l.b16 %v346
        %v362 = vpack.c.b16 %v359, %v358
        %v363 = vpack.c.b16 %v361, %v360
        %vm366 = vcmask 261120
        %v368 = vsel %vm366, %v342, 0
        %370 = vmatprep.subr.bf16.mxu0 0
        %371 = vmatpush1.bf16.msra.mxu0 %v362
        %372 = vmatprep.subr.bf16.mxu0 0
        %373 = vmatpush1.bf16.msra.mxu0 %v363
        %374 = vmatprep.subr.bf16.mxu0 0
        %375 = vmatpush1.bf16.msra.mxu0 0
        %376 = vmatprep.subr.bf16.mxu0 0
        %377 = vmatpush1.bf16.msra.mxu0 0
        %378 = vmatprep.subr.bf16.mxu0 0
        %379 = vmatpush1.bf16.msra.mxu0 0
        %380 = vmatprep.subr.bf16.mxu0 0
        %381 = vmatpush1.bf16.msra.mxu0 0
        %382 = vmatprep.subr.bf16.mxu0 0
        %383 = vmatpush1.bf16.msra.mxu0 0
        %384 = vmatprep.subr.bf16.mxu0 0
        %385 = vmatpush1.bf16.msra.mxu0 0
        %386 = vmatprep.subr.bf16.mxu0 0
        %387 = vmatpush1.bf16.msra.mxu0 0
        %388 = vmatprep.subr.bf16.mxu0 0
        %389 = vmatpush1.bf16.msra.mxu0 0
        %390 = vmatprep.subr.bf16.mxu0 0
        %391 = vmatpush1.bf16.msra.mxu0 0
        %392 = vmatprep.subr.bf16.mxu0 0
        %393 = vmatpush1.bf16.msra.mxu0 0
        %394 = vmatprep.subr.bf16.mxu0 0
        %395 = vmatpush1.bf16.msra.mxu0 0
        %396 = vmatprep.subr.bf16.mxu0 0
        %397 = vmatpush1.bf16.msra.mxu0 0
        %398 = vmatprep.subr.bf16.mxu0 0
        %399 = vmatpush1.bf16.msra.mxu0 0
        %400 = vmatprep.subr.bf16.mxu0 0
        %401 = vmatpush1.bf16.msra.mxu0 0
        %402 = vmatprep.mubr.bf16.mxu0 0
        %403 = vmatmul.mubr.bf16.gmra.mrb[0].mxu0 %v368
        %v404 = vpop.f32.mrb[0].mxu0
        %v405 = vadd.f32 %v352, %v404
        %v406 = vpop.f32.mrb[0].mxu0
        %v407 = vpop.f32.mrb[0].mxu0
        %v408 = vpop.f32.mrb[0].mxu0
        %409 = vdwg.mxu0
        %v410 = vld [vmem:[%s3] sm:$0x1]
        %v412 = vlaneseq
        %v413 = vshrl.u32 %v412, 7
        %v414 = vsub.s32 0, %v413
        %v415 = vrot.slane %v410, %v414
        %v417 = vadd.f32 %v405, %v415
        %v418 = vmax.f32 %v417, 0.0
        %v419 = vpack.c.bf16 %v418, %v418
        %v420 = vld [vmem:[%s4] sm:$0xf]
        %v421 = vld [vmem:[%s4 + $0x4] sm:$0xf]
        %v422 = vld [vmem:[%s4 + $0x8] sm:$0xf]
        %v423 = vld [vmem:[%s4 + $0xc] sm:$0xf]
        %v424 = vld [vmem:[%s4 + $0x10] sm:$0xf]
        %v425 = vld [vmem:[%s4 + $0x14] sm:$0xf]
        %v426 = vld [vmem:[%s4 + $0x18] sm:$0xf]
        %v427 = vld [vmem:[%s4 + $0x1c] sm:$0xf]
        %v428 = vld [vmem:[%s5] sm:$0x1]
        %v430 = vlaneseq
        %v431 = vshrl.u32 %v430, 7
        %v432 = vsub.s32 0, %v431
        %v433 = vrot.slane %v428, %v432
        %v443 = vunpack.c.l.b16 %v420
        %v444 = vunpack.c.l.b16 %v421
        %v445 = vunpack.c.l.b16 %v422
        %v446 = vunpack.c.l.b16 %v423
        %v447 = vunpack.c.l.b16 %v424
        %v448 = vunpack.c.l.b16 %v425
        %v449 = vunpack.c.l.b16 %v426
        %v450 = vunpack.c.l.b16 %v427
        %v451 = vpack.c.b16 %v444, %v443
        %v452 = vpack.c.b16 %v446, %v445
        %v453 = vpack.c.b16 %v448, %v447
        %v454 = vpack.c.b16 %v450, %v449
        %vm459 = vcmask 523264
        %v461 = vsel %vm459, %v419, 0
        %463 = vmatprep.subr.bf16.mxu0 0
        %464 = vmatpush1.bf16.msra.mxu0 %v451
        %465 = vmatprep.subr.bf16.mxu0 0
        %466 = vmatpush1.bf16.msra.mxu0 %v452
        %467 = vmatprep.subr.bf16.mxu0 0
        %468 = vmatpush1.bf16.msra.mxu0 %v453
        %469 = vmatprep.subr.bf16.mxu0 0
        %470 = vmatpush1.bf16.msra.mxu0 %v454
        %471 = vmatprep.subr.bf16.mxu0 0
        %472 = vmatpush1.bf16.msra.mxu0 0
        %473 = vmatprep.subr.bf16.mxu0 0
        %474 = vmatpush1.bf16.msra.mxu0 0
        %475 = vmatprep.subr.bf16.mxu0 0
        %476 = vmatpush1.bf16.msra.mxu0 0
        %477 = vmatprep.subr.bf16.mxu0 0
        %478 = vmatpush1.bf16.msra.mxu0 0
        %479 = vmatprep.subr.bf16.mxu0 0
        %480 = vmatpush1.bf16.msra.mxu0 0
        %481 = vmatprep.subr.bf16.mxu0 0
        %482 = vmatpush1.bf16.msra.mxu0 0
        %483 = vmatprep.subr.bf16.mxu0 0
        %484 = vmatpush1.bf16.msra.mxu0 0
        %485 = vmatprep.subr.bf16.mxu0 0
        %486 = vmatpush1.bf16.msra.mxu0 0
        %487 = vmatprep.subr.bf16.mxu0 0
        %488 = vmatpush1.bf16.msra.mxu0 0
        %489 = vmatprep.subr.bf16.mxu0 0
        %490 = vmatpush1.bf16.msra.mxu0 0
        %491 = vmatprep.subr.bf16.mxu0 0
        %492 = vmatpush1.bf16.msra.mxu0 0
        %493 = vmatprep.subr.bf16.mxu0 0
        %494 = vmatpush1.bf16.msra.mxu0 0
        %495 = vmatprep.mubr.bf16.mxu0 0
        %496 = vmatmul.mubr.bf16.gmra.mrb[0].mxu0 %v461
        %v497 = vpop.f32.mrb[0].mxu0
        %v498 = vadd.f32 %v433, %v497
        %v499 = vpop.f32.mrb[0].mxu0
        %v500 = vpop.f32.mrb[0].mxu0
        %v501 = vpop.f32.mrb[0].mxu0
        %502 = vdwg.mxu0
        %v503 = vadd.f32 %v498, %v341
        %v504 = vsel %vm366, %v503, 0.0
        %505 = vadd.xlane.f32.xlu0 %v504
        %v506 = vpop.xlane.xlu0 %505
        %v507 = vrcp.pop 32.0
        %v508 = vmul.f32 %v506, %v507
        %v509 = vsub.f32 %v503, %v508
        %v510 = vmul.f32 %v509, %v509
        %v511 = vsel %vm366, %v510, 0.0
        %512 = vadd.xlane.f32.xlu0 %v511
        %v513 = vpop.xlane.xlu0 %512
        %v514 = vmul.f32 %v513, %v507
        %v515 = vadd.f32 %v514, 1e-06
        %v516 = vrsqrt.pop %v515
        %v517 = vmul.f32 %v509, %v516
        %v518 = vld [vmem:[%s6] sm:$0x1]
        %v520 = vlaneseq
        %v521 = vshrl.u32 %v520, 7
        %v522 = vsub.s32 0, %v521
        %v523 = vrot.slane %v518, %v522
        %v525 = vmul.f32 %v517, %v523
        %v526 = vld [vmem:[%s7] sm:$0x1]
        %v528 = vlaneseq
        %v529 = vshrl.u32 %v528, 7
        %v530 = vsub.s32 0, %v529
        %v531 = vrot.slane %v526, %v530
        %v533 = vadd.f32 %v525, %v531
        %534 = vst.msk [vmem:[%s329] sm:$0xff] %vm366, %v533
        %s535 = sand.u32 %s224, 1
        %s536 = scalar_lea.sflag [#allocation3], %s535
        %s537 = sand.u32 %s224, 1
        %s538 = smul.addr %s537, 8
        %s539 = scalar_lea.vmem [#allocation2], %s538
        // Predicated region
        $region53: #{tpu_custom_call.1} parent=51 // pred_check
          %p540 = pneg %p234
        $region54: #{tpu_custom_call.1} parent=51 // pred_check_branch
          %542 = sbr.rel (%p540) target = $region56
        $region55: #{tpu_custom_call.1} parent=51 // pred_region
          %s544 = ssub.s32 128, 128
          %545 = vsyncadd %s536, %s544
          %s546 = sadd.s32 %s27, %s26
          %s547 = smul.addr %s546, 128
          %s548 = scalar_lea.hbm %s8, %s547
          %s550 = sshll.u32 %s539, 4
          %s551 = int_to_ptr.vmem [resolvable:$true] %s550
          %553 = dma.vmem_to_hbm [thread:$0]  %s551, 128, %s548, %s536
        $region56: #{tpu_custom_call.1} parent=51 // pred_fallthru
          _
      $region52: #{tpu_custom_call.1} parent=5 // pred_fallthru
        _
      %p554 = scmp.le.s32.totalorder 2, %s17
      // Predicated region
      $region57: #{tpu_custom_call.1} parent=5 // pred_check
        %p555 = pneg %p554
      $region58: #{tpu_custom_call.1} parent=5 // pred_check_branch
        %557 = sbr.rel (%p555) target = $region60
      $region59: #{tpu_custom_call.1} parent=5 // pred_region
        %s558 = ssub.s32 %s17, 2
        // Predicated region
        $region61: #{tpu_custom_call.1} parent=59 // pred_check
          %p559 = pneg %p240
        $region62: #{tpu_custom_call.1} parent=59 // pred_check_branch
          %561 = sbr.rel (%p559) target = $region64
        $region63: #{tpu_custom_call.1} parent=59 // pred_region
          %s562 = sand.u32 %s225, 1
          %s563 = scalar_lea.sflag [#allocation3], %s562
          %s564 = sand.u32 %s225, 1
          %s565 = smul.addr %s564, 8
          %s566 = scalar_lea.vmem [#allocation2], %s565
          %567 = dma.done %s563, 128
        $region64: #{tpu_custom_call.1} parent=59 // pred_fallthru
          _
      $region60: #{tpu_custom_call.1} parent=5 // pred_fallthru
        _
    $region6: #{tpu_custom_call.1} parent=1 // loop_footer
      %s21 = sadd.s32 1, %s17
    $region7: #{tpu_custom_call.1} parent=1 // loop_footer_branch
      %16 = sbr.rel target = $region3
    $region8: #{tpu_custom_call.1} parent=1 // loop_exit
      _
    %568 = vsyncpa [#allocation3], 1
    %s569 = scalar_lea.sflag [#allocation3], 1
    %570 = vsyncpa %s569, 1

</llo_original>
